<compile_context>
chip_gen: v6e
topology: v6e:2x2x1
jax: 0.10.0
libtpu: 0.0.40
codegen_flags: <defaults>
</compile_context>

<pallas_src>
import jax
import jax.numpy as jnp
from jax.experimental import pallas as pl
from jax.experimental.pallas import tpu as pltpu


def _round_up(x, m):
    return -(-x // m) * m


def _vmem_capacity_bytes():
    """Physical per-core VMEM; fall back to the smallest (v7x: 64 MiB) if unknown."""
    try:
        return int(pltpu.get_tpu_info().vmem_capacity_bytes)
    except Exception:
        return 64 << 20


def _pick_tile_n(n_rows, num_classes, itemsize, vmem_capacity):
    """Rows per (TILE_N, C) block.

    Byte-budgeted (no hard row cap), sublane-aligned for the input dtype, and
    capped so there are >= 2 balanced tiles when the batch is big enough
    (v7x megacore sharding + pipeline overlap).
    """
    itemsize = max(int(itemsize), 1)
    align = max(8, 32 // itemsize)              # 8 for f32, 16 for bf16, 32 for int8
    n_aligned = _round_up(n_rows, align)

    big_vmem = vmem_capacity >= (100 << 20)     # v5e/v6e: 128 MiB; v7x: 64 MiB
    block_budget = (6 << 20) if big_vmem else int(2.5 * (1 << 20))

    t = block_budget // max(num_classes * itemsize, 1)
    if n_rows >= 2 * align:                     # keep at least 2 balanced tiles
        t = min(t, _round_up(-(-n_rows // 2), align))
    t = min(t, n_aligned)
    t = max(align, (t // align) * align)
    return int(t)


def _vmem_limit_bytes(tile_n, num_classes, itemsize, vmem_capacity):
    """Scoped-VMEM limit derived from actual block sizes (generation aware)."""
    in_block = tile_n * num_classes * int(itemsize)
    f32_block = tile_n * num_classes * 4
    # double-buffered preds + ~5 live (TILE_N, C) f32 temporaries + headroom
    need = 2 * in_block + 5 * f32_block + (4 << 20)
    cap = (vmem_capacity * 3) // 4
    return int(max(32 << 20, min(need, cap)))


def _per_row_poly(preds_ref, target_ref, weight_ref, *, epsilon, alpha):
    """Per-row poly-1 loss for one (TILE_N, C) block.  All math in f32."""
    x = preds_ref[...].astype(jnp.float32)             # (T, C)
    t = target_ref[...]                                 # (T, 1) int32
    c = x.shape[-1]

    # (1, C) class iota; the compare broadcasts against t -> (T, C) bool mask.
    class_ids = jax.lax.broadcasted_iota(jnp.int32, (1, c), 1)
    mask = class_ids == t

    # Numerically stable log-sum-exp; no full softmax materialized.
    m = jnp.max(x, axis=-1, keepdims=True)               # (T, 1)
    shifted = x - m                                       # (T, C)
    denom = jnp.sum(jnp.exp(shifted), axis=-1, keepdims=True)            # (T, 1)
    x_t = jnp.sum(jnp.where(mask, shifted, 0.0), axis=-1, keepdims=True)  # (T, 1)

    nll = jnp.log(denom) - x_t                            # -log_softmax[target]
    pt = jnp.exp(-nll)                                    # softmax[target]

    if weight_ref is not None:
        w = weight_ref[...].astype(jnp.float32)           # (1, C)
        w_t = jnp.sum(jnp.where(mask, w, 0.0), axis=-1, keepdims=True)
        ce = w_t * nll                                    # weight only on CE term
    else:
        ce = nll

    omp = 1.0 - pt
    return ce + epsilon * omp + alpha * (omp * omp)       # (T, 1) f32


def _make_poly1_kernel(*, epsilon, alpha, has_weight, reduce_in_kernel,
                       n_rows, tile_n):
    def kernel(*refs):
        if has_weight:
            preds_ref, target_ref, weight_ref, out_ref = refs
        else:
            preds_ref, target_ref, out_ref = refs
            weight_ref = None

        poly = _per_row_poly(preds_ref, target_ref, weight_ref,
                             epsilon=epsilon, alpha=alpha)

        if reduce_in_kernel:
            # Ragged last block reads unspecified data past row N: mask those
            # rows, then fold this tile's partial sum into the resident scalar.
            row0 = pl.program_id(0) * tile_n
            rid = row0 + jax.lax.broadcasted_iota(jnp.int32, poly.shape, 0)
            poly = jnp.where(rid < n_rows, poly, 0.0)

            @pl.when(pl.program_id(0) == 0)
            def _init():
                out_ref[...] = jnp.zeros_like(out_ref)

            out_ref[...] += jnp.sum(poly, keepdims=True)   # (1, 1)
        else:
            # Ragged last block: Pallas masks out-of-bounds rows on write-back.
            out_ref[...] = poly

    return kernel


def poly1_cross_entropy_loss(preds, target, *, num_classes, epsilon=1.0,
                             alpha=0.0, reduction="none", weight=None):
    """JAX/Pallas equivalent of Poly1CrossEntropyLoss.forward.

    preds:  [N, num_classes] float
    target: [N] integer class indices
    Returns per-sample f32 losses, or an f32 scalar for 'sum'/'mean'.
    """
    n, c = preds.shape
    assert c == num_classes

    target2d = target.reshape(n, 1).astype(jnp.int32)

    itemsize = jnp.dtype(preds.dtype).itemsize
    vmem_cap = _vmem_capacity_bytes()
    tile_n = _pick_tile_n(n, c, itemsize, vmem_cap)
    num_tiles = pl.cdiv(n, tile_n)            # no jnp.pad: ragged last block

    reduce_in_kernel = reduction in ("sum", "mean")
    has_weight = weight is not None

    in_specs = [
        pl.BlockSpec((tile_n, c), lambda i: (i, 0)),
        pl.BlockSpec((tile_n, 1), lambda i: (i, 0)),
    ]
    args = [preds, target2d]
    if has_weight:
        weight2d = jnp.asarray(weight).reshape(1, c).astype(jnp.float32)
        in_specs.append(pl.BlockSpec((1, c), lambda i: (0, 0)))
        args.append(weight2d)

    if reduce_in_kernel:
        # Fold the reduction in-kernel: grid-resident (1,1) accumulator; the
        # batch axis becomes a reduction axis -> 'arbitrary'.
        out_shape = jax.ShapeDtypeStruct((1, 1), jnp.float32)
        out_spec = pl.BlockSpec((1, 1), lambda i: (0, 0))
        semantics = ("arbitrary",)
    else:
        # Per-sample column output: output bytes <= 1/C of the input read, so
        # the narrow store is not the bottleneck for this memory-bound kernel.
        out_shape = jax.ShapeDtypeStruct((n, 1), jnp.float32)
        out_spec = pl.BlockSpec((tile_n, 1), lambda i: (i, 0))
        semantics = ("parallel",)             # megacore sharding on v7x

    kernel = _make_poly1_kernel(
        epsilon=float(epsilon), alpha=float(alpha), has_weight=has_weight,
        reduce_in_kernel=reduce_in_kernel, n_rows=n, tile_n=tile_n)

    compiler_params = pltpu.CompilerParams(
        dimension_semantics=semantics,
        vmem_limit_bytes=_vmem_limit_bytes(tile_n, c, itemsize, vmem_cap),
    )

    out = pl.pallas_call(
        kernel,
        out_shape=out_shape,
        grid=(num_tiles,),
        in_specs=in_specs,
        out_specs=out_spec,
        compiler_params=compiler_params,
    )(*args)

    if reduction == "mean":
        return out[0, 0] / n
    if reduction == "sum":
        return out[0, 0]
    return out.reshape(n)


def _ref_loss(preds, target, *, epsilon, alpha, reduction, weight=None):
    """Plain-JAX reference mirroring the PyTorch module."""
    logp = jax.nn.log_softmax(preds.astype(jnp.float32), axis=-1)
    p = jnp.exp(logp)
    oh = jax.nn.one_hot(target, preds.shape[-1], dtype=jnp.float32)
    pt = jnp.sum(oh * p, axis=-1)
    nll = -jnp.sum(oh * logp, axis=-1)
    ce = nll if weight is None else nll * weight[target]
    poly = ce + epsilon * (1.0 - pt) + alpha * (1.0 - pt) ** 2
    if reduction == "mean":
        return jnp.mean(poly)
    if reduction == "sum":
        return jnp.sum(poly)
    return poly


if __name__ == "__main__":
    key = jax.random.PRNGKey(0)
    k1, k2, k3, k4 = jax.random.split(key, 4)

    # --- small, tile-aligned case: weight=None, reduction='none' (module default) ---
    n, num_classes = 8, 32
    preds = jax.random.normal(k1, (n, num_classes), dtype=jnp.float32)
    target = jax.random.randint(k2, (n,), 0, num_classes, dtype=jnp.int32)

    loss = poly1_cross_entropy_loss(preds, target, num_classes=num_classes,
                                    epsilon=1.0, alpha=0.0, reduction="none")
    loss = jax.block_until_ready(loss)
    ref = _ref_loss(preds, target, epsilon=1.0, alpha=0.0, reduction="none")
    assert jnp.allclose(loss, ref, atol=1e-5, rtol=1e-5), (loss, ref)

    # --- weighted + alpha + mean (in-kernel reduction path) ---
    w = jnp.linspace(0.5, 1.5, num_classes, dtype=jnp.float32)
    loss_w = poly1_cross_entropy_loss(preds, target, num_classes=num_classes,
                                      epsilon=2.0, alpha=0.1, reduction="mean",
                                      weight=w)
    loss_w = jax.block_until_ready(loss_w)
    ref_w = _ref_loss(preds, target, epsilon=2.0, alpha=0.1, reduction="mean",
                      weight=w)
    assert jnp.allclose(loss_w, ref_w, atol=1e-5, rtol=1e-5), (loss_w, ref_w)

    # --- ragged batch (N not a multiple of the tile): multi-tile + masking paths ---
    n2 = 300
    preds2 = jax.random.normal(k3, (n2, num_classes), dtype=jnp.float32)
    target2 = jax.random.randint(k4, (n2,), 0, num_classes, dtype=jnp.int32)

    loss2 = poly1_cross_entropy_loss(preds2, target2, num_classes=num_classes,
                                     epsilon=1.0, alpha=0.25, reduction="none",
                                     weight=w)
    loss2 = jax.block_until_ready(loss2)
    ref2 = _ref_loss(preds2, target2, epsilon=1.0, alpha=0.25, reduction="none",
                     weight=w)
    assert jnp.allclose(loss2, ref2, atol=1e-5, rtol=1e-5), "ragged 'none' mismatch"

    loss2s = poly1_cross_entropy_loss(preds2, target2, num_classes=num_classes,
                                      epsilon=1.0, alpha=0.0, reduction="sum")
    loss2s = jax.block_until_ready(loss2s)
    ref2s = _ref_loss(preds2, target2, epsilon=1.0, alpha=0.0, reduction="sum")
    assert jnp.allclose(loss2s, ref2s, atol=1e-3, rtol=1e-5), (loss2s, ref2s)

    print("KERNEL_OK")
</pallas_src>

<mosaic_0001>
module attributes {stable_mosaic.version = 11 : i64} {
  func.func @kernel(%arg0: i32, %arg1: memref<8x32xf32, #tpu.memory_space<vmem>>, %arg2: memref<8x1xi32, #tpu.memory_space<vmem>>, %arg3: memref<8x1xf32, #tpu.memory_space<vmem>>) attributes {dimension_semantics = [#tpu.dimension_semantics<parallel>], iteration_bounds = array<i64: 1>, scalar_prefetch = 0 : i64, scratch_operands = 0 : i64, tpu.core_type = #tpu.core_type<tc>, window_params = [{transform_indices = @transform_0, window_bounds = array<i64: 8, 32>}, {transform_indices = @transform_1, window_bounds = array<i64: 8, 1>}, {transform_indices = @transform_2, window_bounds = array<i64: 8, 1>}]} {
    %c0 = arith.constant 0 : index
    %c0_0 = arith.constant 0 : index
    %0 = vector.load %arg1[%c0, %c0_0] : memref<8x32xf32, #tpu.memory_space<vmem>>, vector<8x32xf32>
    %c0_1 = arith.constant 0 : index
    %c0_2 = arith.constant 0 : index
    %1 = vector.load %arg2[%c0_1, %c0_2] : memref<8x1xi32, #tpu.memory_space<vmem>>, vector<8x1xi32>
    %2 = tpu.iota {dimensions = array<i32: 1>} : vector<1x32xi32>
    %3 = vector.broadcast %2 : vector<1x32xi32> to vector<8x32xi32>
    %4 = vector.broadcast %1 : vector<8x1xi32> to vector<8x32xi32>
    %5 = arith.cmpi eq, %3, %4 : vector<8x32xi32>
    %cst = arith.constant dense<0xFF800000> : vector<8xf32>
    %6 = vector.multi_reduction <maximumf>, %0, %cst [1] : vector<8x32xf32> to vector<8xf32>
    %7 = vector.shape_cast %6 : vector<8xf32> to vector<8x1xf32>
    %8 = vector.broadcast %7 : vector<8x1xf32> to vector<8x32xf32>
    %9 = arith.subf %0, %8 : vector<8x32xf32>
    %10 = math.exp %9 : vector<8x32xf32>
    %cst_3 = arith.constant dense<0.000000e+00> : vector<8xf32>
    %11 = vector.multi_reduction <add>, %10, %cst_3 [1] : vector<8x32xf32> to vector<8xf32>
    %12 = vector.shape_cast %11 : vector<8xf32> to vector<8x1xf32>
    %cst_4 = arith.constant 0.000000e+00 : f32
    %13 = vector.broadcast %cst_4 : f32 to vector<8x32xf32>
    %14 = arith.select %5, %9, %13 : vector<8x32xi1>, vector<8x32xf32>
    %cst_5 = arith.constant dense<0.000000e+00> : vector<8xf32>
    %15 = vector.multi_reduction <add>, %14, %cst_5 [1] : vector<8x32xf32> to vector<8xf32>
    %16 = vector.shape_cast %15 : vector<8xf32> to vector<8x1xf32>
    %17 = math.log %12 : vector<8x1xf32>
    %18 = arith.subf %17, %16 : vector<8x1xf32>
    %cst_6 = arith.constant 0.000000e+00 : f32
    %19 = vector.broadcast %cst_6 : f32 to vector<8x1xf32>
    %20 = arith.subf %19, %18 : vector<8x1xf32>
    %21 = math.exp %20 : vector<8x1xf32>
    %cst_7 = arith.constant 1.000000e+00 : f32
    %22 = vector.broadcast %cst_7 : f32 to vector<8x1xf32>
    %23 = arith.subf %22, %21 : vector<8x1xf32>
    %cst_8 = arith.constant 1.000000e+00 : f32
    %24 = vector.broadcast %cst_8 : f32 to vector<8x1xf32>
    %25 = arith.mulf %24, %23 : vector<8x1xf32>
    %26 = arith.addf %18, %25 : vector<8x1xf32>
    %27 = arith.mulf %23, %23 : vector<8x1xf32>
    %cst_9 = arith.constant 0.000000e+00 : f32
    %28 = vector.broadcast %cst_9 : f32 to vector<8x1xf32>
    %29 = arith.mulf %28, %27 : vector<8x1xf32>
    %30 = arith.addf %26, %29 : vector<8x1xf32>
    %c0_10 = arith.constant 0 : index
    %c0_11 = arith.constant 0 : index
    %31 = vector.load %arg3[%c0_10, %c0_11] : memref<8x1xf32, #tpu.memory_space<vmem>>, vector<8x1xf32>
    tpu.vector_store %arg3[%c0_10, %c0_11], %30 {strides = array<i32>} : memref<8x1xf32, #tpu.memory_space<vmem>>, vector<8x1xf32>,
    return
  }
  func.func @transform_0(%arg0: i32) -> (i32, i32) {
    %c0_i32 = arith.constant 0 : i32
    %c0_i32_0 = arith.constant 0 : i32
    return %arg0, %c0_i32 : i32, i32
  }
  func.func @transform_1(%arg0: i32) -> (i32, i32) {
    %c0_i32 = arith.constant 0 : i32
    %c0_i32_0 = arith.constant 0 : i32
    return %arg0, %c0_i32 : i32, i32
  }
  func.func @transform_2(%arg0: i32) -> (i32, i32) {
    %c0_i32 = arith.constant 0 : i32
    %c0_i32_0 = arith.constant 0 : i32
    return %arg0, %c0_i32 : i32, i32
  }
}

</mosaic_0001>

<llo_original>
// kernel: tpu_custom_call.1
$region0: #{tpu_custom_call.1}
  #allocation0 [shape = 'u32[]', space=smem, size = 0x4, offset = 0x4, fixed_abs, tag = 'smem constant byte address 0x4 - core index']
  #allocation1 [shape = 'u32[144,128]{1,0:T(1,128)}', space=vmem, size = 0x12000, scoped, tag = 'internal scratch']
  %s0 = inlined_call_operand.vmem [shape: f32[8,32], index: 0, kind: input, shape index: {}]
  %s1 = inlined_call_operand.vmem [shape: s32[8,1], index: 1, kind: input, shape index: {}]
  %s2 = inlined_call_operand.vmem [shape: f32[8,1], index: 2, kind: output, shape index: {}]
  %s3 = sld [smem:[#allocation0]]
  $region18: #{tpu_custom_call.1} parent=0
    _
  %s5 = ssub.s32 1, %s3
  %s6 = scalar_select 0, %s5, %s3
  // Predicated region
  $region2: #{tpu_custom_call.1} parent=0 // pred_check
    _
  $region3: #{tpu_custom_call.1} parent=0 // pred_check_branch
    %8 = sbr.rel (0) target = $region5
  $region4: #{tpu_custom_call.1} parent=0 // pred_region
    _
  $region5: #{tpu_custom_call.1} parent=0 // pred_fallthru
    _
  // Predicated region
  $region6: #{tpu_custom_call.1} parent=0 // pred_check
    _
  $region7: #{tpu_custom_call.1} parent=0 // pred_check_branch
    %10 = sbr.rel (0) target = $region9
  $region8: #{tpu_custom_call.1} parent=0 // pred_region
    _
  $region9: #{tpu_custom_call.1} parent=0 // pred_fallthru
    _
  %v11 = vld [vmem:[%s0] sm:$0xff]
  %v12 = vld [vmem:[%s1] sm:$0xff]
  %v13 = vlaneseq
  %v14 = vand.u32 %v13, 127
  %15 = vset.pattern.permute.xlu0 0
  %16 = vperm.xlu0 %15, %v12
  %v17 = vpop.permute.xlu0 %16
  %vm18 = vcmp.eq.s32.totalorder %v14, %v17
  %vm19 = vcmask 261120
  %v20 = vsel %vm19, %v11, -inf
  %21 = vmax.xlane.f32.xlu0 %v20
  %v22 = vpop.xlane.xlu0 %21
  %v23 = vsub.f32 %v11, %v22
  %v24 = vmul.f32 %v23, 1.442695
  %v25 = vpow.pop %v24
  %v26 = vsel %vm19, %v25, 0.0
  %27 = vadd.xlane.f32.xlu0 %v26
  %v28 = vpop.xlane.xlu0 %27
  %v29 = vsel %vm18, %v23, 0.0
  %v30 = vsel %vm19, %v29, 0.0
  %31 = vadd.xlane.f32.xlu0 %v30
  %v32 = vpop.xlane.xlu0 %31
  %v33 = vlog2.pop %v28
  %v34 = vmul.f32 %v33, 0.6931472
  %v35 = vsub.f32 %v34, %v32
  %v36 = vsub.f32 0.0, %v35
  %v37 = vmul.f32 %v36, 1.442695
  %v38 = vpow.pop %v37
  %v39 = vsub.f32 1.0, %v38
  %v40 = vadd.f32 %v35, %v39
  %v41 = vmul.f32 %v39, %v39
  %v42 = vmul.f32 %v41, 0.0
  %v43 = vadd.f32 %v40, %v42
  %vm44 = vcmask 7168
  %45 = vst.msk [vmem:[%s2] sm:$0xff] %vm44, %v43
  // Predicated region
  $region10: #{tpu_custom_call.1} parent=0 // pred_check
    _
  $region11: #{tpu_custom_call.1} parent=0 // pred_check_branch
    %47 = sbr.rel (0) target = $region13
  $region12: #{tpu_custom_call.1} parent=0 // pred_region
    _
  $region13: #{tpu_custom_call.1} parent=0 // pred_fallthru
    _
  // Predicated region
  $region14: #{tpu_custom_call.1} parent=0 // pred_check
    _
  $region15: #{tpu_custom_call.1} parent=0 // pred_check_branch
    %49 = sbr.rel (0) target = $region17
  $region16: #{tpu_custom_call.1} parent=0 // pred_region
    _
  $region17: #{tpu_custom_call.1} parent=0 // pred_fallthru
    _

</llo_original>
